<compile_context>
chip_gen: v7x
topology: tpu7x:2x2x1
jax: 0.10.0
libtpu: 0.0.40
codegen_flags: <defaults>
</compile_context>

<pallas_src>
import math

import jax
import jax.numpy as jnp
from jax.experimental import pallas as pl
from jax.experimental.pallas import tpu as pltpu


# ----------------------------------------------------------------------------
# Heuristics (static, host-side)
# ----------------------------------------------------------------------------
def _device_kind():
    try:
        return jax.devices()[0].device_kind.lower()
    except Exception:
        return ""


def _pick_q_tile(S):
    # v5e: 128 matches its 128x128 MXU; v6e/v7x: 256 fills the 256x256 MXU M
    # dim and amortizes the per-grid-step overhead.
    pref = 128 if "v5" in _device_kind() else 256
    if S <= pref:
        return S
    for t in (pref, 256, 128):
        if t <= S and S % t == 0:
            return t
    return S


def _pick_proj_chunk(S):
    for t in (512, 256, 128):
        if S >= t and S % t == 0:
            return t
    return S


def _pick_kv_tile(S):
    for t in (512, 256, 128):
        if S % t == 0:
            return t
    return None


def _auto_vmem_limit(S, D, TQ, proj_chunk, kv_tile):
    kv_span = kv_tile if kv_tile is not None else S
    need = 0
    need += 2 * S * D * 2                      # x block (bf16), double-buffered
    need += 2 * (D * D * 2 + D * 4)            # wq (bf16) + bq (f32)
    need += 2 * (2 * D * D * 2 + 2 * D * 4)    # w_kv (bf16) + b_kv (f32)
    need += 2 * TQ * D * 4                     # output block (f32)
    need += 2 * S * D * 2                      # K / V VMEM scratch (bf16)
    need += 2 * proj_chunk * 2 * D * 4         # f32 K/V projection intermediate
    need += 4 * TQ * kv_span * 4               # score / exp live copies (f32)
    need += 3 * TQ * D * 4                     # q / acc intermediates (f32)
    est = int(need * 1.5) + (4 << 20)          # 50% + 4 MiB headroom
    cap = (56 << 20) if "7" in _device_kind() else (100 << 20)
    return max(32 << 20, min(cap, est))


# ----------------------------------------------------------------------------
# Kernel
# ----------------------------------------------------------------------------
def _make_kernel(proj_chunk, n_proj_chunks, kv_tile):
    def kernel(x_ref, wq_ref, bq_ref, wkv_ref, bkv_ref, o_ref, k_s, v_s):
        # x_ref:  (S, D) bf16 full sequence of this batch element (batch squeezed)
        # wq_ref: (D, D) bf16 (1/sqrt(D) pre-folded);   bq_ref: (1, D) f32 (pre-folded)
        # wkv_ref:(D, 2D) bf16 fused K/V weight;        bkv_ref:(1, 2D) f32
        # o_ref:  (TQ, D) output tile
        # k_s/v_s:(S, D) bf16 VMEM scratch, persistent across the q-tile axis
        qi = pl.program_id(1)
        S, D = x_ref.shape
        TQ = o_ref.shape[0]

        # Once per batch element: fused K/V projection, chunked over S rows so
        # the live f32 intermediate is only (proj_chunk, 2D).
        @pl.when(qi == 0)
        def _():
            def project(c, carry):
                r0 = pl.multiple_of(c * proj_chunk, proj_chunk)
                xc = x_ref[pl.ds(r0, proj_chunk), :]
                kv = jnp.dot(xc, wkv_ref[...],
                             preferred_element_type=jnp.float32) + bkv_ref[...]
                k_s[pl.ds(r0, proj_chunk), :] = kv[:, :D].astype(jnp.bfloat16)
                v_s[pl.ds(r0, proj_chunk), :] = kv[:, D:].astype(jnp.bfloat16)
                return carry

            jax.lax.fori_loop(0, n_proj_chunks, project, 0)

        # Q tile projected on the fly from the resident x block (no q scratch).
        row0 = pl.multiple_of(qi * TQ, TQ)
        x_q = x_ref[pl.ds(row0, TQ), :]
        q = (jnp.dot(x_q, wq_ref[...], preferred_element_type=jnp.float32)
             + bq_ref[...]).astype(jnp.bfloat16)        # scale already folded in

        if kv_tile is None:
            # Small/medium S: full-row numerically-stable softmax.
            # QK^T contracts the last dims via dot_general — no explicit k.T,
            # so no XLU transpose / relaid-out VMEM copy of K.
            s = jax.lax.dot_general(q, k_s[...], (((1,), (1,)), ((), ())),
                                    preferred_element_type=jnp.float32)
            s_max = jnp.max(s, axis=-1, keepdims=True)
            e = jnp.exp(s - s_max)
            denom = jnp.sum(e, axis=-1, keepdims=True)
            p = e * pl.reciprocal(denom, approx=True)
            out = jnp.dot(p.astype(jnp.bfloat16), v_s[...],
                          preferred_element_type=jnp.float32)
        else:
            # Large S: online softmax over KV tiles bounds live intermediates
            # to (TQ, kv_tile) f32 (v7x VMEM budget).
            n_kv = S // kv_tile

            def kv_step(ki, carry):
                m, l, acc = carry
                k0 = pl.multiple_of(ki * kv_tile, kv_tile)
                k_blk = k_s[pl.ds(k0, kv_tile), :]
                v_blk = v_s[pl.ds(k0, kv_tile), :]
                s = jax.lax.dot_general(q, k_blk, (((1,), (1,)), ((), ())),
                                        preferred_element_type=jnp.float32)
                m_new = jnp.maximum(m, jnp.max(s, axis=-1, keepdims=True))
                alpha = jnp.exp(m - m_new)
                p = jnp.exp(s - m_new)
                l_new = alpha * l + jnp.sum(p, axis=-1, keepdims=True)
                acc_new = alpha * acc + jnp.dot(
                    p.astype(jnp.bfloat16), v_blk,
                    preferred_element_type=jnp.float32)
                return m_new, l_new, acc_new

            m0 = jnp.full((TQ, 1), -jnp.inf, dtype=jnp.float32)
            l0 = jnp.zeros((TQ, 1), dtype=jnp.float32)
            a0 = jnp.zeros((TQ, D), dtype=jnp.float32)
            _, l, acc = jax.lax.fori_loop(0, n_kv, kv_step, (m0, l0, a0))
            out = acc * pl.reciprocal(l, approx=True)

        o_ref[...] = out.astype(o_ref.dtype)

    return kernel


# ----------------------------------------------------------------------------
# Wrapper
# ----------------------------------------------------------------------------
def self_attention(x, wq, bq, wk, bk, wv, bv, *, q_tile=None, kv_tile=None,
                   vmem_limit_bytes=None):
    """x: (B, S, D) float32.  Weights: (D, D) (W_torch.T); biases: (D,)."""
    B, S, D = x.shape
    out_dtype = x.dtype
    scale = 1.0 / math.sqrt(D)

    # Host-side prep (negligible cost, done once):
    #  * fold 1/sqrt(D) into the Q projection weights/bias,
    #  * fuse K and V into a single (D, 2D) weight / (1, 2D) bias,
    #  * cast weights and x to bf16 (f32 accumulation is kept in-kernel).
    wq_s = (wq * scale).astype(jnp.bfloat16)
    bq_s = (bq * scale).astype(jnp.float32).reshape(1, D)
    w_kv = jnp.concatenate([wk, wv], axis=1).astype(jnp.bfloat16)
    b_kv = jnp.concatenate([bk, bv], axis=0).astype(jnp.float32).reshape(1, 2 * D)
    x16 = x.astype(jnp.bfloat16)

    if q_tile is None:
        q_tile = _pick_q_tile(S)
    assert S % q_tile == 0, "q_tile must evenly divide the sequence length"
    n_q = S // q_tile

    proj_chunk = _pick_proj_chunk(S)
    n_proj_chunks = S // proj_chunk

    if kv_tile is None and S >= 4096:
        kv_tile = _pick_kv_tile(S)
    if kv_tile is not None:
        assert S % kv_tile == 0, "kv_tile must evenly divide the sequence length"

    if vmem_limit_bytes is None:
        vmem_limit_bytes = _auto_vmem_limit(S, D, q_tile, proj_chunk, kv_tile)

    kernel = _make_kernel(proj_chunk, n_proj_chunks, kv_tile)

    grid_spec = pltpu.PrefetchScalarGridSpec(
        num_scalar_prefetch=0,
        grid=(B, n_q),
        in_specs=[
            # Full (bf16) sequence per batch element; the block index is
            # constant over the q-tile axis, so it is fetched once per batch.
            pl.BlockSpec((pl.Squeezed(), S, D), lambda b, qi: (b, 0, 0)),
            pl.BlockSpec((D, D), lambda b, qi: (0, 0)),       # wq (pre-scaled)
            pl.BlockSpec((1, D), lambda b, qi: (0, 0)),       # bq (pre-scaled)
            pl.BlockSpec((D, 2 * D), lambda b, qi: (0, 0)),   # fused W_kv
            pl.BlockSpec((1, 2 * D), lambda b, qi: (0, 0)),   # fused b_kv
        ],
        out_specs=pl.BlockSpec((pl.Squeezed(), q_tile, D),
                               lambda b, qi: (b, qi, 0)),
        scratch_shapes=[
            pltpu.VMEM((S, D), jnp.bfloat16),   # cached K
            pltpu.VMEM((S, D), jnp.bfloat16),   # cached V
        ],
    )

    return pl.pallas_call(
        kernel,
        out_shape=jax.ShapeDtypeStruct((B, S, D), out_dtype),
        grid_spec=grid_spec,
        compiler_params=pltpu.CompilerParams(
            dimension_semantics=("parallel", "arbitrary"),
            vmem_limit_bytes=vmem_limit_bytes,
        ),
    )(x16, wq_s, bq_s, w_kv, b_kv)


# ----------------------------------------------------------------------------
# Reference + demo
# ----------------------------------------------------------------------------
def _reference(x, wq, bq, wk, bk, wv, bv):
    D = x.shape[-1]
    q = x @ wq + bq
    k = x @ wk + bk
    v = x @ wv + bv
    s = jnp.einsum("bqd,bkd->bqk", q, k) / math.sqrt(D)
    s = s - jnp.max(s, axis=-1, keepdims=True)
    e = jnp.exp(s)
    p = e / jnp.sum(e, axis=-1, keepdims=True)
    return jnp.einsum("bqk,bkd->bqd", p, v)


if __name__ == "__main__":
    B, S, D = 2, 8, 32

    key = jax.random.PRNGKey(0)
    kx, kwq, kbq, kwk, kbk, kwv, kbv = jax.random.split(key, 7)

    x = jax.random.normal(kx, (B, S, D), dtype=jnp.float32)

    # Deterministic parameter init (uniform ~ PyTorch Linear default range).
    bound = 1.0 / math.sqrt(D)
    wq = jax.random.uniform(kwq, (D, D), jnp.float32, -bound, bound)
    bq = jax.random.uniform(kbq, (D,), jnp.float32, -bound, bound)
    wk = jax.random.uniform(kwk, (D, D), jnp.float32, -bound, bound)
    bk = jax.random.uniform(kbk, (D,), jnp.float32, -bound, bound)
    wv = jax.random.uniform(kwv, (D, D), jnp.float32, -bound, bound)
    bv = jax.random.uniform(kbv, (D,), jnp.float32, -bound, bound)

    out = self_attention(x, wq, bq, wk, bk, wv, bv)
    out = jax.block_until_ready(out)

    ref = _reference(x, wq, bq, wk, bk, wv, bv)
    assert out.shape == (B, S, D)
    # Tolerance reflects bf16 MXU operands (+ approx reciprocal); accumulation
    # and softmax statistics are f32.
    assert jnp.allclose(out, ref, atol=3e-2, rtol=3e-2), "mismatch vs reference"

    print("KERNEL_OK")
</pallas_src>

<mosaic_0001>
module attributes {stable_mosaic.version = 11 : i64} {
  func.func @kernel(%arg0: i32, %arg1: i32, %arg2: memref<1x8x32xbf16, #tpu.memory_space<vmem>>, %arg3: memref<32x32xbf16, #tpu.memory_space<vmem>>, %arg4: memref<1x32xf32, #tpu.memory_space<vmem>>, %arg5: memref<32x64xbf16, #tpu.memory_space<vmem>>, %arg6: memref<1x64xf32, #tpu.memory_space<vmem>>, %arg7: memref<1x8x32xf32, #tpu.memory_space<vmem>>, %arg8: memref<8x32xbf16, #tpu.memory_space<vmem>>, %arg9: memref<8x32xbf16, #tpu.memory_space<vmem>>) attributes {dimension_semantics = [#tpu.dimension_semantics<parallel>, #tpu.dimension_semantics<arbitrary>], iteration_bounds = array<i64: 2, 1>, scalar_prefetch = 0 : i64, scratch_operands = 2 : i64, tpu.core_type = #tpu.core_type<tc>, window_params = [{transform_indices = @transform_0, window_bounds = array<i64: 1, 8, 32>}, {pipeline_mode = #tpu.pipeline_mode<synchronous>, transform_indices = @transform_1, window_bounds = array<i64: 32, 32>}, {pipeline_mode = #tpu.pipeline_mode<synchronous>, transform_indices = @transform_2, window_bounds = array<i64: 1, 32>}, {pipeline_mode = #tpu.pipeline_mode<synchronous>, transform_indices = @transform_3, window_bounds = array<i64: 32, 64>}, {pipeline_mode = #tpu.pipeline_mode<synchronous>, transform_indices = @transform_4, window_bounds = array<i64: 1, 64>}, {transform_indices = @transform_5, window_bounds = array<i64: 1, 8, 32>}]} {
    %c0_i32 = arith.constant 0 : i32
    %0 = arith.cmpi eq, %arg1, %c0_i32 : i32
    %1 = arith.extui %0 : i1 to i32
    %c0_i32_0 = arith.constant 0 : i32
    %2 = arith.cmpi ne, %1, %c0_i32_0 : i32
    scf.if %2 {
      %c0_i32_17 = arith.constant 0 : i32
      %c8_i32_18 = arith.constant 8 : i32
      %32 = arith.muli %c0_i32_17, %c8_i32_18 : i32
      %33 = tpu.assume_multiple %32, 8 : i32
      %c0_19 = arith.constant 0 : index
      %34 = arith.index_cast %33 : i32 to index
      %c0_20 = arith.constant 0 : index
      %35 = vector.load %arg2[%c0_19, %34, %c0_20] : memref<1x8x32xbf16, #tpu.memory_space<vmem>>, vector<1x8x32xbf16>
      %36 = vector.shape_cast %35 : vector<1x8x32xbf16> to vector<8x32xbf16>
      %c0_21 = arith.constant 0 : index
      %c0_22 = arith.constant 0 : index
      %37 = vector.load %arg5[%c0_21, %c0_22] : memref<32x64xbf16, #tpu.memory_space<vmem>>, vector<32x64xbf16>
      %cst_23 = arith.constant dense<0.000000e+00> : vector<8x64xf32>
      %38 = tpu.matmul %36, %37, %cst_23 {dimension_numbers = #tpu.dot_dimension_numbers<[1], [0], [0], [1], [0, 0, 1, 1], [], []>} : vector<8x32xbf16>, vector<32x64xbf16>, vector<8x64xf32> -> vector<8x64xf32>
      %c0_24 = arith.constant 0 : index
      %c0_25 = arith.constant 0 : index
      %39 = vector.load %arg6[%c0_24, %c0_25] : memref<1x64xf32, #tpu.memory_space<vmem>>, vector<1x64xf32>
      %40 = vector.broadcast %39 : vector<1x64xf32> to vector<8x64xf32>
      %41 = arith.addf %38, %40 : vector<8x64xf32>
      %42 = vector.extract_strided_slice %41 {offsets = [0, 0], sizes = [8, 32], strides = [1, 1]} : vector<8x64xf32> to vector<8x32xf32>
      %43 = arith.truncf %42 : vector<8x32xf32> to vector<8x32xbf16>
      %44 = arith.index_cast %33 : i32 to index
      %c0_26 = arith.constant 0 : index
      %45 = vector.load %arg8[%44, %c0_26] : memref<8x32xbf16, #tpu.memory_space<vmem>>, vector<8x32xbf16>
      tpu.vector_store %arg8[%44, %c0_26], %43 {strides = array<i32>} : memref<8x32xbf16, #tpu.memory_space<vmem>>, vector<8x32xbf16>,
      %46 = vector.extract_strided_slice %41 {offsets = [0, 32], sizes = [8, 32], strides = [1, 1]} : vector<8x64xf32> to vector<8x32xf32>
      %47 = arith.truncf %46 : vector<8x32xf32> to vector<8x32xbf16>
      %48 = arith.index_cast %33 : i32 to index
      %c0_27 = arith.constant 0 : index
      %49 = vector.load %arg9[%48, %c0_27] : memref<8x32xbf16, #tpu.memory_space<vmem>>, vector<8x32xbf16>
      tpu.vector_store %arg9[%48, %c0_27], %47 {strides = array<i32>} : memref<8x32xbf16, #tpu.memory_space<vmem>>, vector<8x32xbf16>,
      %c1_i32 = arith.constant 1 : i32
    } else {
    }
    %c8_i32 = arith.constant 8 : i32
    %3 = arith.muli %arg1, %c8_i32 : i32
    %4 = tpu.assume_multiple %3, 8 : i32
    %c0 = arith.constant 0 : index
    %5 = arith.index_cast %4 : i32 to index
    %c0_1 = arith.constant 0 : index
    %6 = vector.load %arg2[%c0, %5, %c0_1] : memref<1x8x32xbf16, #tpu.memory_space<vmem>>, vector<1x8x32xbf16>
    %7 = vector.shape_cast %6 : vector<1x8x32xbf16> to vector<8x32xbf16>
    %c0_2 = arith.constant 0 : index
    %c0_3 = arith.constant 0 : index
    %8 = vector.load %arg3[%c0_2, %c0_3] : memref<32x32xbf16, #tpu.memory_space<vmem>>, vector<32x32xbf16>
    %cst = arith.constant dense<0.000000e+00> : vector<8x32xf32>
    %9 = tpu.matmul %7, %8, %cst {dimension_numbers = #tpu.dot_dimension_numbers<[1], [0], [0], [1], [0, 0, 1, 1], [], []>} : vector<8x32xbf16>, vector<32x32xbf16>, vector<8x32xf32> -> vector<8x32xf32>
    %c0_4 = arith.constant 0 : index
    %c0_5 = arith.constant 0 : index
    %10 = vector.load %arg4[%c0_4, %c0_5] : memref<1x32xf32, #tpu.memory_space<vmem>>, vector<1x32xf32>
    %11 = vector.broadcast %10 : vector<1x32xf32> to vector<8x32xf32>
    %12 = arith.addf %9, %11 : vector<8x32xf32>
    %13 = arith.truncf %12 : vector<8x32xf32> to vector<8x32xbf16>
    %c0_6 = arith.constant 0 : index
    %c0_7 = arith.constant 0 : index
    %14 = vector.load %arg8[%c0_6, %c0_7] : memref<8x32xbf16, #tpu.memory_space<vmem>>, vector<8x32xbf16>
    %cst_8 = arith.constant dense<0.000000e+00> : vector<8x8xf32>
    %15 = tpu.matmul %13, %14, %cst_8 {dimension_numbers = #tpu.dot_dimension_numbers<[1], [1], [0], [0], [0, 0, 1, 0], [], []>} : vector<8x32xbf16>, vector<8x32xbf16>, vector<8x8xf32> -> vector<8x8xf32>
    %cst_9 = arith.constant dense<0xFF800000> : vector<8xf32>
    %16 = vector.multi_reduction <maximumf>, %15, %cst_9 [1] : vector<8x8xf32> to vector<8xf32>
    %17 = vector.shape_cast %16 : vector<8xf32> to vector<8x1xf32>
    %18 = vector.broadcast %17 : vector<8x1xf32> to vector<8x8xf32>
    %19 = arith.subf %15, %18 : vector<8x8xf32>
    %20 = math.exp %19 : vector<8x8xf32>
    %cst_10 = arith.constant dense<0.000000e+00> : vector<8xf32>
    %21 = vector.multi_reduction <add>, %20, %cst_10 [1] : vector<8x8xf32> to vector<8xf32>
    %22 = vector.shape_cast %21 : vector<8xf32> to vector<8x1xf32>
    %23 = tpu.reciprocal %22 {approx = true} : vector<8x1xf32> -> vector<8x1xf32>
    %24 = vector.broadcast %23 : vector<8x1xf32> to vector<8x8xf32>
    %25 = arith.mulf %20, %24 : vector<8x8xf32>
    %26 = arith.truncf %25 : vector<8x8xf32> to vector<8x8xbf16>
    %c0_11 = arith.constant 0 : index
    %c0_12 = arith.constant 0 : index
    %27 = vector.load %arg9[%c0_11, %c0_12] : memref<8x32xbf16, #tpu.memory_space<vmem>>, vector<8x32xbf16>
    %cst_13 = arith.constant dense<0.000000e+00> : vector<8x32xf32>
    %28 = tpu.matmul %26, %27, %cst_13 {dimension_numbers = #tpu.dot_dimension_numbers<[1], [0], [0], [1], [0, 0, 1, 1], [], []>} : vector<8x8xbf16>, vector<8x32xbf16>, vector<8x32xf32> -> vector<8x32xf32>
    %c0_14 = arith.constant 0 : index
    %c0_15 = arith.constant 0 : index
    %c0_16 = arith.constant 0 : index
    %29 = vector.load %arg7[%c0_14, %c0_15, %c0_16] : memref<1x8x32xf32, #tpu.memory_space<vmem>>, vector<1x8x32xf32>
    %30 = vector.shape_cast %29 : vector<1x8x32xf32> to vector<8x32xf32>
    %31 = vector.shape_cast %28 : vector<8x32xf32> to vector<1x8x32xf32>
    tpu.vector_store %arg7[%c0_14, %c0_15, %c0_16], %31 {strides = array<i32>} : memref<1x8x32xf32, #tpu.memory_space<vmem>>, vector<1x8x32xf32>,
    return
  }
  func.func @transform_0(%arg0: i32, %arg1: i32) -> (i32, i32, i32) {
    %c0_i32 = arith.constant 0 : i32
    %c0_i32_0 = arith.constant 0 : i32
    %c0_i32_1 = arith.constant 0 : i32
    return %arg0, %c0_i32, %c0_i32_0 : i32, i32, i32
  }
  func.func @transform_1(%arg0: i32, %arg1: i32) -> (i32, i32) {
    %c0_i32 = arith.constant 0 : i32
    %c0_i32_0 = arith.constant 0 : i32
    %c0_i32_1 = arith.constant 0 : i32
    return %c0_i32, %c0_i32_0 : i32, i32
  }
  func.func @transform_2(%arg0: i32, %arg1: i32) -> (i32, i32) {
    %c0_i32 = arith.constant 0 : i32
    %c0_i32_0 = arith.constant 0 : i32
    %c0_i32_1 = arith.constant 0 : i32
    return %c0_i32, %c0_i32_0 : i32, i32
  }
  func.func @transform_3(%arg0: i32, %arg1: i32) -> (i32, i32) {
    %c0_i32 = arith.constant 0 : i32
    %c0_i32_0 = arith.constant 0 : i32
    %c0_i32_1 = arith.constant 0 : i32
    return %c0_i32, %c0_i32_0 : i32, i32
  }
  func.func @transform_4(%arg0: i32, %arg1: i32) -> (i32, i32) {
    %c0_i32 = arith.constant 0 : i32
    %c0_i32_0 = arith.constant 0 : i32
    %c0_i32_1 = arith.constant 0 : i32
    return %c0_i32, %c0_i32_0 : i32, i32
  }
  func.func @transform_5(%arg0: i32, %arg1: i32) -> (i32, i32, i32) {
    %c0_i32 = arith.constant 0 : i32
    %c0_i32_0 = arith.constant 0 : i32
    return %arg0, %arg1, %c0_i32 : i32, i32, i32
  }
}

</mosaic_0001>

<llo_original>
// kernel: tpu_custom_call.1
$region0: #{tpu_custom_call.1}
  #allocation0 [shape = 'u32[]', space=smem, size = 0x4, offset = 0x4, fixed_abs, tag = 'smem constant byte address 0x4 - core index']
  #allocation1 [shape = 'u32[144,128]{1,0:T(1,128)}', space=vmem, size = 0x12000, scoped, tag = 'internal scratch']
  #allocation2 [shape = 'bf16[8,32]{1,0:T(8,128)(2,1)}', space=vmem, size = 0x800, scoped, tag = 'scratch operand']
  #allocation3 [shape = 'bf16[8,32]{1,0:T(8,128)(2,1)}', space=vmem, size = 0x800, scoped, tag = 'scratch operand']
  %s0 = inlined_call_operand.hbm [shape: bf16[2,8,32], index: 0, kind: input, shape index: {}]
  %s1 = inlined_call_operand.hbm [shape: bf16[32,32], index: 1, kind: input, shape index: {}]
  %s2 = inlined_call_operand.vmem [shape: f32[1,32], index: 2, kind: input, shape index: {}]
  %s3 = inlined_call_operand.hbm [shape: bf16[32,64], index: 3, kind: input, shape index: {}]
  %s4 = inlined_call_operand.vmem [shape: f32[1,64], index: 4, kind: input, shape index: {}]
  %s5 = inlined_call_operand.hbm [shape: f32[2,8,32], index: 5, kind: output, shape index: {}]
  %s6 = sld [smem:[#allocation0]]
  $region69: #{tpu_custom_call.1} parent=0
    _
  %s8 = ssub.s32 1, %s6
  %s9 = scalar_select 0, %s8, %s6
  $region1: #{tpu_custom_call.1} parent=0
    #allocation4 [shape = 'u8[4096]{0}', space=vmem, size = 0x1000, scoped, tag = 'input window, operand 0']
    #allocation5 [shape = 's32[2]{0}', space=sflag, size = 0x8, scoped, tag = 'scoped memory for tpu_custom_call.1']
    #allocation6 [shape = 's32[2]{0}', space=sflag, size = 0x8, scoped, tag = 'scoped memory for tpu_custom_call.1']
    #allocation7 [shape = 'u8[8192]{0}', space=vmem, size = 0x2000, scoped, tag = 'input window, operand 1, single buffered']
    #allocation8 [shape = 's32[1]{0}', space=sflag, size = 0x4, scoped, tag = 'scoped memory for tpu_custom_call.1']
    #allocation9 [shape = 'u8[8192]{0}', space=vmem, size = 0x2000, scoped, tag = 'input window, operand 3, single buffered']
    #allocation10 [shape = 'u8[8192]{0}', space=vmem, size = 0x2000, scoped, tag = 'output window, operand 0']
    %10 = vsyncpa [#allocation5], 0
    %s11 = scalar_lea.sflag [#allocation5], 1
    %12 = vsyncpa %s11, 0
    %13 = vsyncpa [#allocation8], 0
    %14 = vsyncpa [#allocation6], 0
    %s15 = scalar_lea.sflag [#allocation6], 1
    %16 = vsyncpa %s15, 0
    loop: start=0, step=1, limit=4
    $region2: #{tpu_custom_call.1} parent=1 // loop_pre_header
      _
    $region3: #{tpu_custom_call.1} parent=1 // loop_header
      %s18 = sphi 0, %s22
      %p19 = scmp.ge.s32.totalorder %s18, 4
      %s25 = sphi 0, %s37
      %s26 = sphi 0, %s33
      %s27 = sphi 0, %s25
      %s28 = sphi 0, %s26
      %s29 = sphi 0, %s27
      %s30 = sphi 0, %s28
      %s40 = sphi 0, %s42
      %s43 = sphi 0, %s40
      %s44 = sphi 0, %s43
      %s60 = sphi 0, %s44
      %s64 = sphi 0, %s64
      %s66 = sphi 0, %s64
      %s67 = sphi 0, %s66
      %s81 = sphi 0, %s67
      %s85 = sphi 0, %s85
      %s87 = sphi 0, %s85
      %s88 = sphi 0, %s87
      %s102 = sphi 0, %s88
      %s106 = sphi 0, %s106
      %s108 = sphi 0, %s106
      %s109 = sphi 0, %s108
      %s123 = sphi 0, %s109
      %s127 = sphi 0, %s127
      %s129 = sphi 0, %s127
      %s130 = sphi 0, %s129
      %s144 = sphi 0, %s130
      %s152 = sphi 0, %s154
      %s155 = sphi 0, %s152
      %s156 = sphi 0, %s155
      %s172 = sphi 0, %s156
    $region4: #{tpu_custom_call.1} parent=1 // loop_header_branch
      %21 = sbr.rel (%p19) target = $region8
    $region5: #{tpu_custom_call.1} parent=1 // loop_body
      %s23 = ssub.s32 %s18, 1
      %s24 = ssub.s32 %s18, 2
      %s31 = sadd.s32 1, %s26
      %p32 = scmp.ge.s32.totalorder %s31, 1
      %s33 = scalar_select %p32, 0, %s31
      %s34 = sadd.s32 1, %s25
      %s35 = scalar_select %p32, %s34, %s25
      %p36 = scmp.ge.s32.totalorder %s35, 2
      %s37 = scalar_select %p36, 0, %s35
      %s38 = ssub.s32 %s25, %s37
      %p39 = scmp.eq.s32.totalorder %s38, 0
      %s41 = sadd.s32 %s40, 1
      %s42 = scalar_select %p39, %s40, %s41
      %p45 = pneg %p39
      %p46 = scmp.eq.s32.totalorder %s18, 1
      %p47 = por %p45, %p46
      %p48 = scmp.ne.s32.totalorder %s40, %s43
      %p49 = scmp.eq.s32.totalorder %s18, 0
      %p50 = por %p48, %p49
      %p51 = scmp.ne.s32.totalorder %s40, %s43
      %p52 = scmp.eq.s32.totalorder %s23, 1
      %p53 = por %p51, %p52
      %p54 = scmp.ne.s32.totalorder %s43, %s44
      %p55 = scmp.eq.s32.totalorder %s23, 0
      %p56 = por %p54, %p55
      %p57 = scmp.ne.s32.totalorder %s43, %s44
      %p58 = scmp.eq.s32.totalorder %s24, 1
      %p59 = por %p57, %p58
      %p61 = scmp.ne.s32.totalorder %s44, %s60
      %p62 = scmp.eq.s32.totalorder %s24, 0
      %p63 = por %p61, %p62
      %s65 = sadd.s32 %s64, 1
      %p68 = scmp.eq.s32.totalorder %s18, 1
      %p69 = scmp.ne.s32.totalorder %s64, %s66
      %p70 = scmp.eq.s32.totalorder %s18, 0
      %p71 = por %p69, %p70
      %p72 = scmp.ne.s32.totalorder %s64, %s66
      %p73 = scmp.eq.s32.totalorder %s23, 1
      %p74 = por %p72, %p73
      %p75 = scmp.ne.s32.totalorder %s66, %s67
      %p76 = scmp.eq.s32.totalorder %s23, 0
      %p77 = por %p75, %p76
      %p78 = scmp.ne.s32.totalorder %s66, %s67
      %p79 = scmp.eq.s32.totalorder %s24, 1
      %p80 = por %p78, %p79
      %p82 = scmp.ne.s32.totalorder %s67, %s81
      %p83 = scmp.eq.s32.totalorder %s24, 0
      %p84 = por %p82, %p83
      %s86 = sadd.s32 %s85, 1
      %p89 = scmp.eq.s32.totalorder %s18, 1
      %p90 = scmp.ne.s32.totalorder %s85, %s87
      %p91 = scmp.eq.s32.totalorder %s18, 0
      %p92 = por %p90, %p91
      %p93 = scmp.ne.s32.totalorder %s85, %s87
      %p94 = scmp.eq.s32.totalorder %s23, 1
      %p95 = por %p93, %p94
      %p96 = scmp.ne.s32.totalorder %s87, %s88
      %p97 = scmp.eq.s32.totalorder %s23, 0
      %p98 = por %p96, %p97
      %p99 = scmp.ne.s32.totalorder %s87, %s88
      %p100 = scmp.eq.s32.totalorder %s24, 1
      %p101 = por %p99, %p100
      %p103 = scmp.ne.s32.totalorder %s88, %s102
      %p104 = scmp.eq.s32.totalorder %s24, 0
      %p105 = por %p103, %p104
      %s107 = sadd.s32 %s106, 1
      %p110 = scmp.eq.s32.totalorder %s18, 1
      %p111 = scmp.ne.s32.totalorder %s106, %s108
      %p112 = scmp.eq.s32.totalorder %s18, 0
      %p113 = por %p111, %p112
      %p114 = scmp.ne.s32.totalorder %s106, %s108
      %p115 = scmp.eq.s32.totalorder %s23, 1
      %p116 = por %p114, %p115
      %p117 = scmp.ne.s32.totalorder %s108, %s109
      %p118 = scmp.eq.s32.totalorder %s23, 0
      %p119 = por %p117, %p118
      %p120 = scmp.ne.s32.totalorder %s108, %s109
      %p121 = scmp.eq.s32.totalorder %s24, 1
      %p122 = por %p120, %p121
      %p124 = scmp.ne.s32.totalorder %s109, %s123
      %p125 = scmp.eq.s32.totalorder %s24, 0
      %p126 = por %p124, %p125
      %s128 = sadd.s32 %s127, 1
      %p131 = scmp.eq.s32.totalorder %s18, 1
      %p132 = scmp.ne.s32.totalorder %s127, %s129
      %p133 = scmp.eq.s32.totalorder %s18, 0
      %p134 = por %p132, %p133
      %p135 = scmp.ne.s32.totalorder %s127, %s129
      %p136 = scmp.eq.s32.totalorder %s23, 1
      %p137 = por %p135, %p136
      %p138 = scmp.ne.s32.totalorder %s129, %s130
      %p139 = scmp.eq.s32.totalorder %s23, 0
      %p140 = por %p138, %p139
      %p141 = scmp.ne.s32.totalorder %s129, %s130
      %p142 = scmp.eq.s32.totalorder %s24, 1
      %p143 = por %p141, %p142
      %p145 = scmp.ne.s32.totalorder %s130, %s144
      %p146 = scmp.eq.s32.totalorder %s24, 0
      %p147 = por %p145, %p146
      %s148 = ssub.s32 %s25, %s37
      %s149 = ssub.s32 %s26, %s33
      %s150 = sor.u32 %s148, %s149
      %p151 = scmp.eq.s32.totalorder %s150, 0
      %s153 = sadd.s32 %s152, 1
      %s154 = scalar_select %p151, %s152, %s153
      %p157 = pneg %p151
      %p158 = scmp.eq.s32.totalorder %s18, 1
      %p159 = por %p157, %p158
      %p160 = scmp.ne.s32.totalorder %s152, %s155
      %p161 = scmp.eq.s32.totalorder %s18, 0
      %p162 = por %p160, %p161
      %p163 = scmp.ne.s32.totalorder %s152, %s155
      %p164 = scmp.eq.s32.totalorder %s23, 1
      %p165 = por %p163, %p164
      %p166 = scmp.ne.s32.totalorder %s155, %s156
      %p167 = scmp.eq.s32.totalorder %s23, 0
      %p168 = por %p166, %p167
      %p169 = scmp.ne.s32.totalorder %s155, %s156
      %p170 = scmp.eq.s32.totalorder %s24, 1
      %p171 = por %p169, %p170
      %p173 = scmp.ne.s32.totalorder %s156, %s172
      %p174 = scmp.eq.s32.totalorder %s24, 0
      %p175 = por %p173, %p174
      %p176 = scmp.le.s32.totalorder 1, %s18
      %p177 = scmp.lt.s32.totalorder %s18, 3
      %p178 = pnand %p176, %p177
      %p179 = pneg %p178
      // Predicated region
      $region9: #{tpu_custom_call.1} parent=5 // pred_check
        _
      $region10: #{tpu_custom_call.1} parent=5 // pred_check_branch
        %181 = sbr.rel (%p178) target = $region12
      $region11: #{tpu_custom_call.1} parent=5 // pred_region
        %s182 = ssub.s32 %s18, 1
        // Predicated region
        $region13: #{tpu_custom_call.1} parent=11 // pred_check
          %p183 = pneg %p77
        $region14: #{tpu_custom_call.1} parent=11 // pred_check_branch
          %185 = sbr.rel (%p183) target = $region16
        $region15: #{tpu_custom_call.1} parent=11 // pred_region
          %s187 = ssub.s32 256, 256
          %188 = vsyncadd [#allocation8], %s187
          %s189 = sshll.u32 [#allocation7], 4
          %s190 = int_to_ptr.vmem [resolvable:$true] %s189
          %195 = dma.hbm_to_vmem [thread:$0]  %s1, 256, %s190, [#allocation8], 64, 64, 4
        $region16: #{tpu_custom_call.1} parent=11 // pred_fallthru
          _
        // Predicated region
        $region17: #{tpu_custom_call.1} parent=11 // pred_check
          %p196 = pneg %p98
        $region18: #{tpu_custom_call.1} parent=11 // pred_check_branch
          %198 = sbr.rel (%p196) target = $region20
        $region19: #{tpu_custom_call.1} parent=11 // pred_region
          _
        $region20: #{tpu_custom_call.1} parent=11 // pred_fallthru
          _
        // Predicated region
        $region21: #{tpu_custom_call.1} parent=11 // pred_check
          %p199 = pneg %p119
        $region22: #{tpu_custom_call.1} parent=11 // pred_check_branch
          %201 = sbr.rel (%p199) target = $region24
        $region23: #{tpu_custom_call.1} parent=11 // pred_region
          %s203 = ssub.s32 256, 256
          %204 = vsyncadd [#allocation8], %s203
          %s205 = sshll.u32 [#allocation9], 4
          %s206 = int_to_ptr.vmem [resolvable:$true] %s205
          %211 = dma.hbm_to_vmem [thread:$0]  %s3, 256, %s206, [#allocation8], 64, 64, 4
        $region24: #{tpu_custom_call.1} parent=11 // pred_fallthru
          _
        // Predicated region
        $region25: #{tpu_custom_call.1} parent=11 // pred_check
          %p212 = pneg %p140
        $region26: #{tpu_custom_call.1} parent=11 // pred_check_branch
          %214 = sbr.rel (%p212) target = $region28
        $region27: #{tpu_custom_call.1} parent=11 // pred_region
          _
        $region28: #{tpu_custom_call.1} parent=11 // pred_fallthru
          _
      $region12: #{tpu_custom_call.1} parent=5 // pred_fallthru
        _
      %p215 = scmp.lt.s32.totalorder %s18, 2
      // Predicated region
      $region29: #{tpu_custom_call.1} parent=5 // pred_check
        %p216 = pneg %p215
      $region30: #{tpu_custom_call.1} parent=5 // pred_check_branch
        %218 = sbr.rel (%p216) target = $region32
      $region31: #{tpu_custom_call.1} parent=5 // pred_region
        // Predicated region
        $region33: #{tpu_custom_call.1} parent=31 // pred_check
          %p219 = pneg %p50
        $region34: #{tpu_custom_call.1} parent=31 // pred_check_branch
          %221 = sbr.rel (%p219) target = $region36
        $region35: #{tpu_custom_call.1} parent=31 // pred_region
          %s222 = sand.u32 %s40, 1
          %s223 = scalar_lea.sflag [#allocation5], %s222
          %s224 = sand.u32 %s40, 1
          %s225 = smul.addr %s224, 4
          %s226 = scalar_lea.vmem [#allocation4], %s225
          %s228 = ssub.s32 64, 64
          %229 = vsyncadd %s223, %s228
          %s230 = smul.addr %s25, 64
          %s231 = scalar_lea.hbm %s0, %s230
          %s233 = sshll.u32 %s226, 4
          %s234 = int_to_ptr.vmem [resolvable:$true] %s233
          %236 = dma.hbm_to_vmem [thread:$0]  %s231, 64, %s234, %s223
        $region36: #{tpu_custom_call.1} parent=31 // pred_fallthru
          _
      $region32: #{tpu_custom_call.1} parent=5 // pred_fallthru
        _
      %p237 = scmp.le.s32.totalorder 1, %s18
      %p238 = scmp.lt.s32.totalorder %s18, 3
      %p239 = pnand %p237, %p238
      %p240 = pneg %p239
      // Predicated region
      $region37: #{tpu_custom_call.1} parent=5 // pred_check
        _
      $region38: #{tpu_custom_call.1} parent=5 // pred_check_branch
        %242 = sbr.rel (%p239) target = $region40
      $region39: #{tpu_custom_call.1} parent=5 // pred_region
        %s243 = ssub.s32 %s18, 1
        %s244 = sand.u32 %s43, 1
        %s245 = scalar_lea.sflag [#allocation5], %s244
        %s246 = sand.u32 %s43, 1
        %s247 = smul.addr %s246, 4
        %s248 = scalar_lea.vmem [#allocation4], %s247
        // Predicated region
        $region41: #{tpu_custom_call.1} parent=39 // pred_check
          %p249 = pneg %p56
        $region42: #{tpu_custom_call.1} parent=39 // pred_check_branch
          %251 = sbr.rel (%p249) target = $region44
        $region43: #{tpu_custom_call.1} parent=39 // pred_region
          %252 = dma.done %s245, 64
        $region44: #{tpu_custom_call.1} parent=39 // pred_fallthru
          _
        // Predicated region
        $region45: #{tpu_custom_call.1} parent=39 // pred_check
          %p253 = pneg %p77
        $region46: #{tpu_custom_call.1} parent=39 // pred_check_branch
          %255 = sbr.rel (%p253) target = $region48
        $region47: #{tpu_custom_call.1} parent=39 // pred_region
          %256 = dma.done [#allocation8], 256
        $region48: #{tpu_custom_call.1} parent=39 // pred_fallthru
          _
        // Predicated region
        $region49: #{tpu_custom_call.1} parent=39 // pred_check
          %p257 = pneg %p119
        $region50: #{tpu_custom_call.1} parent=39 // pred_check_branch
          %259 = sbr.rel (%p257) target = $region52
        $region51: #{tpu_custom_call.1} parent=39 // pred_region
          %260 = dma.done [#allocation8], 256
        $region52: #{tpu_custom_call.1} parent=39 // pred_fallthru
          _
        %s261 = sand.u32 %s43, 1
        %s262 = scalar_lea.sflag [#allocation5], %s261
        %s263 = sand.u32 %s43, 1
        %s264 = smul.addr %s263, 4
        %s265 = scalar_lea.vmem [#allocation4], %s264
        %p266 = pneg %p56
        %p267 = pneg %p53
        %p268 = pneg %p77
        %p269 = pneg %p74
        %p270 = pneg %p98
        %p271 = pneg %p95
        %p272 = pneg %p119
        %p273 = pneg %p116
        %p274 = pneg %p140
        %p275 = pneg %p137
        %p276 = pneg %p168
        %p277 = pneg %p165
        %s278 = sand.u32 %s155, 1
        %s279 = scalar_lea.sflag [#allocation6], %s278
        %s280 = sand.u32 %s155, 1
        %s281 = smul.addr %s280, 8
        %s282 = scalar_lea.vmem [#allocation10], %s281
        %p284 = scmp.eq.s32.totalorder %s28, 0
        // Predicated region
        $region53: #{tpu_custom_call.1} parent=39 // pred_check
          %p285 = pneg %p284
        $region54: #{tpu_custom_call.1} parent=39 // pred_check_branch
          %287 = sbr.rel (%p285) target = $region56
        $region55: #{tpu_custom_call.1} parent=39 // pred_region
          %v288 = vld [vmem:[%s248] sm:$0xf]
          %v289 = vld [vmem:[#allocation9] sm:$0xf]
          %v290 = vld [vmem:[#allocation9 + $0x4] sm:$0xf]
          %v291 = vld [vmem:[#allocation9 + $0x8] sm:$0xf]
          %v292 = vld [vmem:[#allocation9 + $0xc] sm:$0xf]
          %v293 = vld [vmem:[%s4] sm:$0x1]
          %v295 = vlaneseq
          %v296 = vshrl.u32 %v295, 7
          %v297 = vsub.s32 0, %v296
          %v298 = vrot.slane %v293, %v297
          %v304 = vunpack.c.l.b16 %v289
          %v305 = vunpack.c.l.b16 %v290
          %v306 = vunpack.c.l.b16 %v291
          %v307 = vunpack.c.l.b16 %v292
          %v308 = vpack.c.b16 %v305, %v304
          %v309 = vpack.c.b16 %v307, %v306
          %vm312 = vcmask 261120
          %v314 = vsel %vm312, %v288, 0
          %316 = vmatprep.subr.bf16.mxu0 0
          %317 = vmatpush1.bf16.msra.mxu0 %v308
          %318 = vmatprep.subr.bf16.mxu0 0
          %319 = vmatpush1.bf16.msra.mxu0 %v309
          %320 = vmatprep.subr.bf16.mxu0 0
          %321 = vmatpush1.bf16.msra.mxu0 0
          %322 = vmatprep.subr.bf16.mxu0 0
          %323 = vmatpush1.bf16.msra.mxu0 0
          %324 = vmatprep.subr.bf16.mxu0 0
          %325 = vmatpush1.bf16.msra.mxu0 0
          %326 = vmatprep.subr.bf16.mxu0 0
          %327 = vmatpush1.bf16.msra.mxu0 0
          %328 = vmatprep.subr.bf16.mxu0 0
          %329 = vmatpush1.bf16.msra.mxu0 0
          %330 = vmatprep.subr.bf16.mxu0 0
          %331 = vmatpush1.bf16.msra.mxu0 0
          %332 = vmatprep.subr.bf16.mxu0 0
          %333 = vmatpush1.bf16.msra.mxu0 0
          %334 = vmatprep.subr.bf16.mxu0 0
          %335 = vmatpush1.bf16.msra.mxu0 0
          %336 = vmatprep.subr.bf16.mxu0 0
          %337 = vmatpush1.bf16.msra.mxu0 0
          %338 = vmatprep.subr.bf16.mxu0 0
          %339 = vmatpush1.bf16.msra.mxu0 0
          %340 = vmatprep.subr.bf16.mxu0 0
          %341 = vmatpush1.bf16.msra.mxu0 0
          %342 = vmatprep.subr.bf16.mxu0 0
          %343 = vmatpush1.bf16.msra.mxu0 0
          %344 = vmatprep.subr.bf16.mxu0 0
          %345 = vmatpush1.bf16.msra.mxu0 0
          %346 = vmatprep.subr.bf16.mxu0 0
          %347 = vmatpush1.bf16.msra.mxu0 0
          %348 = vmatprep.mubr.bf16.mxu0 0
          %349 = vmatmul.mubr.bf16.gmra.mrb[0].mxu0 %v314
          %v350 = vpop.f32.mrb[0].mxu0
          %v351 = vadd.f32 %v298, %v350
          %v352 = vpop.f32.mrb[0].mxu0
          %v353 = vpop.f32.mrb[0].mxu0
          %v354 = vpop.f32.mrb[0].mxu0
          %355 = vdwg.mxu0
          %v356 = vpack.c.bf16 %v351, %v351
          %vm357 = vcmask 257024
          %358 = vst.msk [vmem:[#allocation2] sm:$0xf] %vm357, %v356
          %v360 = vunpack.c.l.b16 %v356
          %v361 = vpack.c.b16 %v360, %v360
          %362 = vrot.lane.b32.xlu0 %v361, 96
          %v363 = vpop.permute.xlu0 %362
          %365 = vst.msk [vmem:[#allocation3] sm:$0xf] %vm357, %v363
        $region56: #{tpu_custom_call.1} parent=39 // pred_fallthru
          _
        %s366 = smul.u32 %s28, 8
        %s367 = sshra.s32 %s366, 3
        %s368 = sand.u32 %s366, 7
        %s369 = smul.addr %s367, 4
        %s370 = scalar_lea.vmem %s248, %s369 [#allocation4]
        %v371 = vld [vmem:[%s370] sm:$0xf]
        %v372 = vld [vmem:[#allocation7] sm:$0xf]
        %v373 = vld [vmem:[#allocation7 + $0x4] sm:$0xf]
        %v374 = vld [vmem:[#allocation7 + $0x8] sm:$0xf]
        %v375 = vld [vmem:[#allocation7 + $0xc] sm:$0xf]
        %v376 = vld [vmem:[%s2] sm:$0x1]
        %v378 = vlaneseq
        %v379 = vshrl.u32 %v378, 7
        %v380 = vsub.s32 0, %v379
        %v381 = vrot.slane %v376, %v380
        %v387 = vunpack.c.l.b16 %v372
        %v388 = vunpack.c.l.b16 %v373
        %v389 = vunpack.c.l.b16 %v374
        %v390 = vunpack.c.l.b16 %v375
        %v391 = vpack.c.b16 %v388, %v387
        %v392 = vpack.c.b16 %v390, %v389
        %vm395 = vcmask 261120
        %v397 = vsel %vm395, %v371, 0
        %399 = vmatprep.subr.bf16.mxu0 0
        %400 = vmatpush1.bf16.msra.mxu0 %v391
        %401 = vmatprep.subr.bf16.mxu0 0
        %402 = vmatpush1.bf16.msra.mxu0 %v392
        %403 = vmatprep.subr.bf16.mxu0 0
        %404 = vmatpush1.bf16.msra.mxu0 0
        %405 = vmatprep.subr.bf16.mxu0 0
        %406 = vmatpush1.bf16.msra.mxu0 0
        %407 = vmatprep.subr.bf16.mxu0 0
        %408 = vmatpush1.bf16.msra.mxu0 0
        %409 = vmatprep.subr.bf16.mxu0 0
        %410 = vmatpush1.bf16.msra.mxu0 0
        %411 = vmatprep.subr.bf16.mxu0 0
        %412 = vmatpush1.bf16.msra.mxu0 0
        %413 = vmatprep.subr.bf16.mxu0 0
        %414 = vmatpush1.bf16.msra.mxu0 0
        %415 = vmatprep.subr.bf16.mxu0 0
        %416 = vmatpush1.bf16.msra.mxu0 0
        %417 = vmatprep.subr.bf16.mxu0 0
        %418 = vmatpush1.bf16.msra.mxu0 0
        %419 = vmatprep.subr.bf16.mxu0 0
        %420 = vmatpush1.bf16.msra.mxu0 0
        %421 = vmatprep.subr.bf16.mxu0 0
        %422 = vmatpush1.bf16.msra.mxu0 0
        %423 = vmatprep.subr.bf16.mxu0 0
        %424 = vmatpush1.bf16.msra.mxu0 0
        %425 = vmatprep.subr.bf16.mxu0 0
        %426 = vmatpush1.bf16.msra.mxu0 0
        %427 = vmatprep.subr.bf16.mxu0 0
        %428 = vmatpush1.bf16.msra.mxu0 0
        %429 = vmatprep.subr.bf16.mxu0 0
        %430 = vmatpush1.bf16.msra.mxu0 0
        %431 = vmatprep.mubr.bf16.mxu0 0
        %432 = vmatmul.mubr.bf16.gmra.mrb[0].mxu0 %v397
        %v433 = vpop.f32.mrb[0].mxu0
        %v434 = vadd.f32 %v381, %v433
        %v435 = vpop.f32.mrb[0].mxu0
        %v436 = vpop.f32.mrb[0].mxu0
        %v437 = vpop.f32.mrb[0].mxu0
        %438 = vdwg.mxu0
        %v439 = vpack.c.bf16 %v434, %v434
        %v440 = vld [vmem:[#allocation2] sm:$0xf]
        %v442 = vsel %vm395, %v439, 0
        %v445 = vsel %vm395, %v440, 0
        %447 = vmatprep.subr.bf16.mxu0 0
        %448 = vmatpush1.bf16.xpose.msra.mxu0 %v445
        %449 = vmatprep.subr.bf16.mxu0 0
        %450 = vmatpush1.bf16.xpose.msra.mxu0 0
        %451 = vmatprep.subr.bf16.mxu0 0
        %452 = vmatpush1.bf16.xpose.msra.mxu0 0
        %453 = vmatprep.subr.bf16.mxu0 0
        %454 = vmatpush1.bf16.xpose.msra.mxu0 0
        %455 = vmatprep.subr.bf16.mxu0 0
        %456 = vmatpush1.bf16.xpose.msra.mxu0 0
        %457 = vmatprep.subr.bf16.mxu0 0
        %458 = vmatpush1.bf16.xpose.msra.mxu0 0
        %459 = vmatprep.subr.bf16.mxu0 0
        %460 = vmatpush1.bf16.xpose.msra.mxu0 0
        %461 = vmatprep.subr.bf16.mxu0 0
        %462 = vmatpush1.bf16.xpose.msra.mxu0 0
        %463 = vmatprep.subr.bf16.mxu0 0
        %464 = vmatpush1.bf16.xpose.msra.mxu0 0
        %465 = vmatprep.subr.bf16.mxu0 0
        %466 = vmatpush1.bf16.xpose.msra.mxu0 0
        %467 = vmatprep.subr.bf16.mxu0 0
        %468 = vmatpush1.bf16.xpose.msra.mxu0 0
        %469 = vmatprep.subr.bf16.mxu0 0
        %470 = vmatpush1.bf16.xpose.msra.mxu0 0
        %471 = vmatprep.subr.bf16.mxu0 0
        %472 = vmatpush1.bf16.xpose.msra.mxu0 0
        %473 = vmatprep.subr.bf16.mxu0 0
        %474 = vmatpush1.bf16.xpose.msra.mxu0 0
        %475 = vmatprep.subr.bf16.mxu0 0
        %476 = vmatpush1.bf16.xpose.msra.mxu0 0
        %477 = vmatprep.subr.bf16.mxu0 0
        %478 = vmatpush1.bf16.xpose.msra.mxu0 0
        %479 = vmatprep.mubr.bf16.mxu0 0
        %480 = vmatmul.mubr.bf16.gmra.mrb[0].mxu0 %v442
        %v481 = vpop.f32.mrb[0].mxu0
        %v482 = vadd.f32 0.0, %v481
        %v483 = vpop.f32.mrb[0].mxu0
        %v484 = vpop.f32.mrb[0].mxu0
        %v485 = vpop.f32.mrb[0].mxu0
        %486 = vdwg.mxu0
        %vm487 = vcmask 64512
        %v488 = vsel %vm487, %v482, -inf
        %489 = vmax.xlane.f32.xlu0 %v488
        %v490 = vpop.xlane.xlu0 %489
        %v491 = vsub.f32 %v482, %v490
        %v492 = vmul.f32 %v491, 1.442695
        %v493 = vpow.pop %v492
        %v494 = vsel %vm487, %v493, 0.0
        %495 = vadd.xlane.f32.xlu0 %v494
        %v496 = vpop.xlane.xlu0 %495
        %v497 = vrcp.pop %v496
        %v498 = vmul.f32 %v493, %v497
        %v499 = vpack.c.bf16 %v498, %v498
        %v500 = vld [vmem:[#allocation3] sm:$0xf]
        %v502 = vsel %vm487, %v499, 0
        %vm504 = vcmask 1043456
        %v506 = vsel %vm504, %v500, 0
        %508 = vmatprep.subr.bf16.mxu0 0
        %509 = vmatpush1.bf16.msra.mxu0 %v506
        %510 = vmatprep.subr.bf16.mxu0 0
        %511 = vmatpush1.bf16.msra.mxu0 0
        %512 = vmatprep.subr.bf16.mxu0 0
        %513 = vmatpush1.bf16.msra.mxu0 0
        %514 = vmatprep.subr.bf16.mxu0 0
        %515 = vmatpush1.bf16.msra.mxu0 0
        %516 = vmatprep.subr.bf16.mxu0 0
        %517 = vmatpush1.bf16.msra.mxu0 0
        %518 = vmatprep.subr.bf16.mxu0 0
        %519 = vmatpush1.bf16.msra.mxu0 0
        %520 = vmatprep.subr.bf16.mxu0 0
        %521 = vmatpush1.bf16.msra.mxu0 0
        %522 = vmatprep.subr.bf16.mxu0 0
        %523 = vmatpush1.bf16.msra.mxu0 0
        %524 = vmatprep.subr.bf16.mxu0 0
        %525 = vmatpush1.bf16.msra.mxu0 0
        %526 = vmatprep.subr.bf16.mxu0 0
        %527 = vmatpush1.bf16.msra.mxu0 0
        %528 = vmatprep.subr.bf16.mxu0 0
        %529 = vmatpush1.bf16.msra.mxu0 0
        %530 = vmatprep.subr.bf16.mxu0 0
        %531 = vmatpush1.bf16.msra.mxu0 0
        %532 = vmatprep.subr.bf16.mxu0 0
        %533 = vmatpush1.bf16.msra.mxu0 0
        %534 = vmatprep.subr.bf16.mxu0 0
        %535 = vmatpush1.bf16.msra.mxu0 0
        %536 = vmatprep.subr.bf16.mxu0 0
        %537 = vmatpush1.bf16.msra.mxu0 0
        %538 = vmatprep.subr.bf16.mxu0 0
        %539 = vmatpush1.bf16.msra.mxu0 0
        %540 = vmatprep.mubr.bf16.mxu0 0
        %541 = vmatmul.mubr.bf16.gmra.mrb[0].mxu0 %v502
        %v542 = vpop.f32.mrb[0].mxu0
        %v543 = vadd.f32 0.0, %v542
        %v544 = vpop.f32.mrb[0].mxu0
        %v545 = vpop.f32.mrb[0].mxu0
        %v546 = vpop.f32.mrb[0].mxu0
        %547 = vdwg.mxu0
        %548 = vst.msk [vmem:[%s282] sm:$0xff] %vm395, %v543
        %s549 = sand.u32 %s155, 1
        %s550 = scalar_lea.sflag [#allocation6], %s549
        %s551 = sand.u32 %s155, 1
        %s552 = smul.addr %s551, 8
        %s553 = scalar_lea.vmem [#allocation10], %s552
        // Predicated region
        $region57: #{tpu_custom_call.1} parent=39 // pred_check
          %p554 = pneg %p165
        $region58: #{tpu_custom_call.1} parent=39 // pred_check_branch
          %556 = sbr.rel (%p554) target = $region60
        $region59: #{tpu_custom_call.1} parent=39 // pred_region
          %s558 = ssub.s32 128, 128
          %559 = vsyncadd %s550, %s558
          %s560 = sadd.s32 %s28, %s27
          %s561 = smul.addr %s560, 128
          %s562 = scalar_lea.hbm %s5, %s561
          %s564 = sshll.u32 %s553, 4
          %s565 = int_to_ptr.vmem [resolvable:$true] %s564
          %567 = dma.vmem_to_hbm [thread:$0]  %s565, 128, %s562, %s550
        $region60: #{tpu_custom_call.1} parent=39 // pred_fallthru
          _
      $region40: #{tpu_custom_call.1} parent=5 // pred_fallthru
        _
      %p568 = scmp.le.s32.totalorder 2, %s18
      // Predicated region
      $region61: #{tpu_custom_call.1} parent=5 // pred_check
        %p569 = pneg %p568
      $region62: #{tpu_custom_call.1} parent=5 // pred_check_branch
        %571 = sbr.rel (%p569) target = $region64
      $region63: #{tpu_custom_call.1} parent=5 // pred_region
        %s572 = ssub.s32 %s18, 2
        // Predicated region
        $region65: #{tpu_custom_call.1} parent=63 // pred_check
          %p573 = pneg %p171
        $region66: #{tpu_custom_call.1} parent=63 // pred_check_branch
          %575 = sbr.rel (%p573) target = $region68
        $region67: #{tpu_custom_call.1} parent=63 // pred_region
          %s576 = sand.u32 %s156, 1
          %s577 = scalar_lea.sflag [#allocation6], %s576
          %s578 = sand.u32 %s156, 1
          %s579 = smul.addr %s578, 8
          %s580 = scalar_lea.vmem [#allocation10], %s579
          %581 = dma.done %s577, 128
        $region68: #{tpu_custom_call.1} parent=63 // pred_fallthru
          _
      $region64: #{tpu_custom_call.1} parent=5 // pred_fallthru
        _
    $region6: #{tpu_custom_call.1} parent=1 // loop_footer
      %s22 = sadd.s32 1, %s18
    $region7: #{tpu_custom_call.1} parent=1 // loop_footer_branch
      %17 = sbr.rel target = $region3
    $region8: #{tpu_custom_call.1} parent=1 // loop_exit
      _
    %582 = vsyncpa [#allocation5], 1
    %s583 = scalar_lea.sflag [#allocation5], 1
    %584 = vsyncpa %s583, 1
    %585 = vsyncpa [#allocation8], 1
    %586 = vsyncpa [#allocation6], 1
    %s587 = scalar_lea.sflag [#allocation6], 1
    %588 = vsyncpa %s587, 1

</llo_original>
